<compile_context>
chip_gen: v6e
topology: v6e:2x2x1
jax: 0.10.0
libtpu: 0.0.40
codegen_flags: <defaults>
</compile_context>

<pallas_src>
import functools

import jax
import jax.numpy as jnp
from jax.experimental import pallas as pl
from jax.experimental.pallas import tpu as pltpu

LANE = 128
SUBLANE = 8
CHUNK_ROWS = 512                       # in-kernel reduction chunk (256 KiB f32)
TILE_BYTES_PER_INPUT = 2 * 1024 * 1024  # per-input per-step DMA tile target
VMEM_LIMIT_BYTES = 32 * 1024 * 1024     # <= default on v6e/v7x, raises v5e's 16 MiB


def _l1_log_sum_kernel(r_ref, f_ref, o_ref, acc_ref, *,
                       m_rows, tm, chunk, mask_from_blk, needs_mask):
    c = pl.program_id(0)          # megacore / partial-sum axis ("parallel")
    i = pl.program_id(1)          # reduction axis ("arbitrary")
    n_inner = pl.num_programs(1)

    @pl.when(i == 0)
    def _():
        acc_ref[...] = jnp.zeros_like(acc_ref)

    n_chunks = tm // chunk
    zero = jnp.zeros((SUBLANE, LANE), jnp.float32)

    def chunk_val(j):
        off = pl.multiple_of(j * chunk, chunk)
        r = r_ref[pl.ds(off, chunk), :].astype(jnp.float32)
        f = f_ref[pl.ds(off, chunk), :].astype(jnp.float32)
        # Two f32 logs per element go to the EUP; hidden under HBM time on
        # v5e/v6e.  TODO(synk): on v7x check xprof for EUP saturation (bf16
        # logs would be the next lever if loss tolerance allows).
        return jnp.abs(jnp.log(r) - jnp.log(f))

    def plain_step(j, carry):
        v = chunk_val(j)
        return carry + jnp.sum(v.reshape(-1, SUBLANE, LANE), axis=0)

    if needs_mask:
        blk = c * n_inner + i     # logical block index

        def masked_step(j, carry):
            v = chunk_val(j)
            row = (blk * tm + j * chunk
                   + jax.lax.broadcasted_iota(jnp.int32, v.shape, 0))
            v = jnp.where(row < m_rows, v, 0.0)
            return carry + jnp.sum(v.reshape(-1, SUBLANE, LANE), axis=0)

        @pl.when(blk >= mask_from_blk)      # only ragged / overflow blocks
        def _():
            acc_ref[...] += jax.lax.fori_loop(0, n_chunks, masked_step, zero)

        @pl.when(blk < mask_from_blk)       # fully-valid blocks: no mask work
        def _():
            acc_ref[...] += jax.lax.fori_loop(0, n_chunks, plain_step, zero)
    else:
        acc_ref[...] += jax.lax.fori_loop(0, n_chunks, plain_step, zero)

    @pl.when(i == n_inner - 1)
    def _():
        o_ref[0, 0] = jnp.sum(acc_ref[...])


def l1_log_loss(fake, real):
    """L1_log loss: mean(|log(real) - log(fake)|). fake/real same shape (NCHW)."""
    # TODO(synk): bilinear-upsample branch (fake.shape != real.shape) not implemented.
    assert fake.shape == real.shape, "upsample branch not supported"

    total = real.size
    m_rows = total // LANE           # full 128-wide rows
    tail = total - m_rows * LANE     # <128 leftover elements

    r1 = real.reshape(-1)
    f1 = fake.reshape(-1)

    if m_rows < SUBLANE:
        # Tiny input: not worth a kernel launch.
        rf, ff = r1.astype(jnp.float32), f1.astype(jnp.float32)
        return jnp.sum(jnp.abs(jnp.log(rf) - jnp.log(ff))) / jnp.float32(total)

    tail_sum = jnp.float32(0.0)
    if tail:
        aligned = m_rows * LANE
        # <128-element ragged tail handled with a tiny wrapper expression
        # (no jnp.pad of the full tensors).
        tr = r1[aligned:].astype(jnp.float32)
        tf = f1[aligned:].astype(jnp.float32)
        tail_sum = jnp.sum(jnp.abs(jnp.log(tr) - jnp.log(tf)))
        # TODO(synk): this prefix slice still costs one HBM copy per input; a
        # fully copy-free ragged path needs 1-D blocks + element-level masking.
        r1 = r1[:aligned]
        f1 = f1[:aligned]

    r2d = r1.reshape(m_rows, LANE)   # free bitcast when tail == 0
    f2d = f1.reshape(m_rows, LANE)

    # Tile sized by bytes of the native dtype (f32 -> 4096 rows, bf16 -> 8192).
    itemsize = jnp.dtype(real.dtype).itemsize
    tm_target = TILE_BYTES_PER_INPUT // (LANE * itemsize)
    tm_target = max(CHUNK_ROWS, (tm_target // CHUNK_ROWS) * CHUNK_ROWS)
    if m_rows >= CHUNK_ROWS:
        tm = min(tm_target, (m_rows // CHUNK_ROWS) * CHUNK_ROWS)
        chunk = CHUNK_ROWS
    else:
        tm = (m_rows // SUBLANE) * SUBLANE
        chunk = tm

    n_blocks = pl.cdiv(m_rows, tm)
    ncores = 2 if n_blocks >= 2 else 1      # v7x megacore split
    inner = pl.cdiv(n_blocks, ncores)

    last_block_partial = (m_rows % tm) != 0
    has_overflow = (ncores * inner) != n_blocks
    needs_mask = last_block_partial or has_overflow
    mask_from_blk = (n_blocks - 1) if last_block_partial else n_blocks

    def in_map(c, i):
        # Clamp so a fully out-of-range logical block re-reads the last valid
        # block; its contribution is zeroed by the in-kernel row mask.
        return (jnp.minimum(c * inner + i, n_blocks - 1), 0)

    tile_spec = pl.BlockSpec((tm, LANE), in_map)
    out_spec = pl.BlockSpec((1, 1), lambda c, i: (c, 0),
                            memory_space=pltpu.MemorySpace.SMEM)

    kernel = functools.partial(
        _l1_log_sum_kernel, m_rows=m_rows, tm=tm, chunk=chunk,
        mask_from_blk=mask_from_blk, needs_mask=needs_mask)

    partial_sums = pl.pallas_call(
        kernel,
        out_shape=jax.ShapeDtypeStruct((ncores, 1), jnp.float32),
        grid=(ncores, inner),
        in_specs=[tile_spec, tile_spec],
        out_specs=out_spec,
        scratch_shapes=[pltpu.VMEM((SUBLANE, LANE), jnp.float32)],
        compiler_params=pltpu.CompilerParams(
            dimension_semantics=("parallel", "arbitrary"),
            vmem_limit_bytes=VMEM_LIMIT_BYTES),
    )(r2d, f2d)

    return (jnp.sum(partial_sums) + tail_sum) / jnp.float32(total)


def _l1_log_reference(fake, real):
    r = real.astype(jnp.float32)
    f = fake.astype(jnp.float32)
    return jnp.mean(jnp.abs(jnp.log(r) - jnp.log(f)))


def _check(fake, real, rtol=2e-4, atol=1e-6):
    out = jax.block_until_ready(l1_log_loss(fake, real))
    ref = jax.block_until_ready(_l1_log_reference(fake, real))
    assert jnp.allclose(out, ref, rtol=rtol, atol=atol), (out, ref)


if __name__ == "__main__":
    key = jax.random.PRNGKey(0)
    k1, k2, k3, k4, k5, k6 = jax.random.split(key, 6)

    # Small NCHW depth-style inputs; log() requires positive values.
    real = jax.random.uniform(k1, (2, 4, 16, 16), jnp.float32, 0.1, 2.0)
    fake = jax.random.uniform(k2, (2, 4, 16, 16), jnp.float32, 0.1, 2.0)
    _check(fake, real)

    # Multi-block / dual-partial-sum / multi-step-reduction path.
    real2 = jax.random.uniform(k3, (4, 8, 256, 256), jnp.float32, 0.1, 2.0)
    fake2 = jax.random.uniform(k4, (4, 8, 256, 256), jnp.float32, 0.1, 2.0)
    _check(fake2, real2)

    # Ragged path: <128-elem tail + partial last block + clamped overflow block.
    real3 = jax.random.uniform(k5, (9, 10, 120, 130), jnp.float32, 0.1, 2.0)
    fake3 = jax.random.uniform(k6, (9, 10, 120, 130), jnp.float32, 0.1, 2.0)
    _check(fake3, real3)

    # bf16 inputs: exercises the dtype-aware (bytes-based) tile sizing.
    _check(fake2.astype(jnp.bfloat16), real2.astype(jnp.bfloat16))

    print("KERNEL_OK")
</pallas_src>

<mosaic_0001>
module attributes {stable_mosaic.version = 11 : i64} {
  func.func @_l1_log_sum_kernel(%arg0: i32, %arg1: i32, %arg2: memref<16x128xf32, #tpu.memory_space<vmem>>, %arg3: memref<16x128xf32, #tpu.memory_space<vmem>>, %arg4: memref<1x1xf32, #tpu.memory_space<smem>>, %arg5: memref<8x128xf32, #tpu.memory_space<vmem>>) attributes {dimension_semantics = [#tpu.dimension_semantics<parallel>, #tpu.dimension_semantics<arbitrary>], iteration_bounds = array<i64: 1, 1>, scalar_prefetch = 0 : i64, scratch_operands = 1 : i64, tpu.core_type = #tpu.core_type<tc>, window_params = [{transform_indices = @transform_0, window_bounds = array<i64: 16, 128>}, {transform_indices = @transform_1, window_bounds = array<i64: 16, 128>}, {transform_indices = @transform_2, window_bounds = array<i64: 1, 1>}]} {
    %c0_i32 = arith.constant 0 : i32
    %0 = arith.cmpi eq, %arg1, %c0_i32 : i32
    %1 = arith.extui %0 : i1 to i32
    %c0_i32_0 = arith.constant 0 : i32
    %2 = arith.cmpi ne, %1, %c0_i32_0 : i32
    scf.if %2 {
      %cst_10 = arith.constant 0.000000e+00 : f32
      %23 = vector.broadcast %cst_10 : f32 to vector<8x128xf32>
      %c0_11 = arith.constant 0 : index
      %c0_12 = arith.constant 0 : index
      %24 = vector.load %arg5[%c0_11, %c0_12] : memref<8x128xf32, #tpu.memory_space<vmem>>, vector<8x128xf32>
      tpu.vector_store %arg5[%c0_11, %c0_12], %23 {strides = array<i32>} : memref<8x128xf32, #tpu.memory_space<vmem>>, vector<8x128xf32>,
    } else {
    }
    %cst = arith.constant 0.000000e+00 : f32
    %3 = vector.broadcast %cst : f32 to vector<8x128xf32>
    %c0 = arith.constant 0 : index
    %c0_1 = arith.constant 0 : index
    %4 = vector.load %arg5[%c0, %c0_1] : memref<8x128xf32, #tpu.memory_space<vmem>>, vector<8x128xf32>
    %c0_i32_2 = arith.constant 0 : i32
    %c16_i32 = arith.constant 16 : i32
    %5 = arith.muli %c0_i32_2, %c16_i32 : i32
    %6 = tpu.assume_multiple %5, 16 : i32
    %7 = arith.index_cast %6 : i32 to index
    %c0_3 = arith.constant 0 : index
    %8 = vector.load %arg2[%7, %c0_3] : memref<16x128xf32, #tpu.memory_space<vmem>>, vector<16x128xf32>
    %9 = arith.index_cast %6 : i32 to index
    %c0_4 = arith.constant 0 : index
    %10 = vector.load %arg3[%9, %c0_4] : memref<16x128xf32, #tpu.memory_space<vmem>>, vector<16x128xf32>
    %11 = math.log %8 : vector<16x128xf32>
    %12 = math.log %10 : vector<16x128xf32>
    %13 = arith.subf %11, %12 : vector<16x128xf32>
    %14 = math.absf %13 : vector<16x128xf32>
    %15 = vector.shape_cast %14 : vector<16x128xf32> to vector<2x8x128xf32>
    %cst_5 = arith.constant dense<0.000000e+00> : vector<8x128xf32>
    %16 = vector.multi_reduction <add>, %15, %cst_5 [0] : vector<2x8x128xf32> to vector<8x128xf32>
    %17 = arith.addf %3, %16 : vector<8x128xf32>
    %c1_i32 = arith.constant 1 : i32
    %18 = arith.addf %4, %17 : vector<8x128xf32>
    %c0_6 = arith.constant 0 : index
    %c0_7 = arith.constant 0 : index
    %19 = vector.load %arg5[%c0_6, %c0_7] : memref<8x128xf32, #tpu.memory_space<vmem>>, vector<8x128xf32>
    tpu.vector_store %arg5[%c0_6, %c0_7], %18 {strides = array<i32>} : memref<8x128xf32, #tpu.memory_space<vmem>>, vector<8x128xf32>,
    %c0_i32_8 = arith.constant 0 : i32
    %20 = arith.cmpi eq, %arg1, %c0_i32_8 : i32
    %21 = arith.extui %20 : i1 to i32
    %c0_i32_9 = arith.constant 0 : i32
    %22 = arith.cmpi ne, %21, %c0_i32_9 : i32
    scf.if %22 {
      %c0_10 = arith.constant 0 : index
      %c0_11 = arith.constant 0 : index
      %23 = vector.load %arg5[%c0_10, %c0_11] : memref<8x128xf32, #tpu.memory_space<vmem>>, vector<8x128xf32>
      %24 = vector.shape_cast %23 : vector<8x128xf32> to vector<1x8x128xf32>
      %cst_12 = arith.constant dense<0.000000e+00> : vector<1xf32>
      %25 = vector.multi_reduction <add>, %24, %cst_12 [1, 2] : vector<1x8x128xf32> to vector<1xf32>
      %26 = vector.shape_cast %25 : vector<1xf32> to vector<1x1x1xf32>
      %27 = vector.extract %26[0, 0, 0] : f32 from vector<1x1x1xf32>
      %c0_13 = arith.constant 0 : index
      %c0_14 = arith.constant 0 : index
      %28 = memref.load %arg4[%c0_13, %c0_14] : memref<1x1xf32, #tpu.memory_space<smem>>
      memref.store %27, %arg4[%c0_13, %c0_14] : memref<1x1xf32, #tpu.memory_space<smem>>
    } else {
    }
    return
  }
  func.func @transform_0(%arg0: i32, %arg1: i32) -> (i32, i32) {
    %c1_i32 = arith.constant 1 : i32
    %0 = arith.muli %arg0, %c1_i32 : i32
    %1 = arith.addi %0, %arg1 : i32
    %c0_i32 = arith.constant 0 : i32
    %2 = arith.minsi %1, %c0_i32 : i32
    %c0_i32_0 = arith.constant 0 : i32
    %c0_i32_1 = arith.constant 0 : i32
    return %2, %c0_i32_0 : i32, i32
  }
  func.func @transform_1(%arg0: i32, %arg1: i32) -> (i32, i32) {
    %c1_i32 = arith.constant 1 : i32
    %0 = arith.muli %arg0, %c1_i32 : i32
    %1 = arith.addi %0, %arg1 : i32
    %c0_i32 = arith.constant 0 : i32
    %2 = arith.minsi %1, %c0_i32 : i32
    %c0_i32_0 = arith.constant 0 : i32
    %c0_i32_1 = arith.constant 0 : i32
    return %2, %c0_i32_0 : i32, i32
  }
  func.func @transform_2(%arg0: i32, %arg1: i32) -> (i32, i32) {
    %c0_i32 = arith.constant 0 : i32
    %c0_i32_0 = arith.constant 0 : i32
    return %arg0, %c0_i32 : i32, i32
  }
}

</mosaic_0001>

<llo_original>
// kernel: tpu_custom_call.1
$region0: #{tpu_custom_call.1}
  #allocation0 [shape = 'u32[]', space=smem, size = 0x4, offset = 0x4, fixed_abs, tag = 'smem constant byte address 0x4 - core index']
  #allocation1 [shape = 'u32[144,128]{1,0:T(1,128)}', space=vmem, size = 0x12000, scoped, tag = 'internal scratch']
  #allocation2 [shape = 'f32[8,128]{1,0:T(8,128)}', space=vmem, size = 0x1000, scoped, tag = 'scratch operand']
  %s0 = inlined_call_operand.hbm [shape: f32[16,128], index: 0, kind: input, shape index: {}]
  %s1 = inlined_call_operand.hbm [shape: f32[16,128], index: 1, kind: input, shape index: {}]
  %s2 = inlined_call_operand.hbm [shape: f32[1,1], index: 2, kind: output, shape index: {}]
  %s3 = sld [smem:[#allocation0]]
  $region34: #{tpu_custom_call.1} parent=0
    _
  %s5 = ssub.s32 1, %s3
  %s6 = scalar_select 0, %s5, %s3
  $region1: #{tpu_custom_call.1} parent=0
    #allocation3 [shape = 'u8[8192]{0}', space=vmem, size = 0x2000, scoped, tag = 'input window, operand 0, single buffered']
    #allocation4 [shape = 's32[1]{0}', space=sflag, size = 0x4, scoped, tag = 'scoped memory for tpu_custom_call.1']
    #allocation5 [shape = 's32[1]{0}', space=sflag, size = 0x4, scoped, tag = 'scoped memory for tpu_custom_call.1']
    #allocation6 [shape = 'u8[8192]{0}', space=vmem, size = 0x2000, scoped, tag = 'input window, operand 1, single buffered']
    #allocation7 [shape = 's32[1]{0}', space=sflag, size = 0x4, scoped, tag = 'scoped memory for tpu_custom_call.1']
    #allocation8 [shape = 'u8[512]{0}', space=smem, size = 0x200, scoped, tag = 'output window, operand 0, single buffered']
    %7 = vsyncpa [#allocation4], 0
    %8 = vsyncpa [#allocation7], 0
    %9 = vsyncpa [#allocation5], 0
    // Predicated region
    $region2: #{tpu_custom_call.1} parent=1 // pred_check
      _
    $region3: #{tpu_custom_call.1} parent=1 // pred_check_branch
      %11 = sbr.rel (0) target = $region5
    $region4: #{tpu_custom_call.1} parent=1 // pred_region
      %s12 = sadd.s32 0, 0
      %p13 = scmp.lt.s32.totalorder %s12, 0
      %s14 = scalar_select %p13, %s12, 0
      %s15 = smul.u32 2, %s14
      %s17 = ssub.s32 256, 256
      %18 = vsyncadd [#allocation4], %s17
      %s19 = smul.addr %s15, 128
      %s20 = scalar_lea.hbm %s0, %s19
      %s21 = sshll.u32 [#allocation3], 4
      %s22 = int_to_ptr.vmem [resolvable:$true] %s21
      %27 = dma.hbm_to_vmem [thread:$0]  %s20, 256, %s22, [#allocation4], 128, 128, 8
    $region5: #{tpu_custom_call.1} parent=1 // pred_fallthru
      _
    // Predicated region
    $region6: #{tpu_custom_call.1} parent=1 // pred_check
      _
    $region7: #{tpu_custom_call.1} parent=1 // pred_check_branch
      %29 = sbr.rel (0) target = $region9
    $region8: #{tpu_custom_call.1} parent=1 // pred_region
      %s30 = sadd.s32 0, 0
      %p31 = scmp.lt.s32.totalorder %s30, 0
      %s32 = scalar_select %p31, %s30, 0
      %s33 = smul.u32 2, %s32
      %s35 = ssub.s32 256, 256
      %36 = vsyncadd [#allocation7], %s35
      %s37 = smul.addr %s33, 128
      %s38 = scalar_lea.hbm %s1, %s37
      %s39 = sshll.u32 [#allocation6], 4
      %s40 = int_to_ptr.vmem [resolvable:$true] %s39
      %45 = dma.hbm_to_vmem [thread:$0]  %s38, 256, %s40, [#allocation7], 128, 128, 8
    $region9: #{tpu_custom_call.1} parent=1 // pred_fallthru
      _
    // Predicated region
    $region10: #{tpu_custom_call.1} parent=1 // pred_check
      _
    $region11: #{tpu_custom_call.1} parent=1 // pred_check_branch
      %47 = sbr.rel (0) target = $region13
    $region12: #{tpu_custom_call.1} parent=1 // pred_region
      %48 = dma.done [#allocation4], 256
    $region13: #{tpu_custom_call.1} parent=1 // pred_fallthru
      _
    // Predicated region
    $region14: #{tpu_custom_call.1} parent=1 // pred_check
      _
    $region15: #{tpu_custom_call.1} parent=1 // pred_check_branch
      %50 = sbr.rel (0) target = $region17
    $region16: #{tpu_custom_call.1} parent=1 // pred_region
      %51 = dma.done [#allocation7], 256
    $region17: #{tpu_custom_call.1} parent=1 // pred_fallthru
      _
    %s52 = sadd.s32 0, 0
    %p53 = scmp.lt.s32.totalorder %s52, 0
    %s54 = scalar_select %p53, %s52, 0
    %s55 = smul.u32 2, %s54
    %s56 = sadd.s32 0, 0
    %p57 = scmp.lt.s32.totalorder %s56, 0
    %s58 = scalar_select %p57, %s56, 0
    %s59 = smul.u32 2, %s58
    %p60 = scmp.eq.s32.totalorder 0, 0
    // Predicated region
    $region18: #{tpu_custom_call.1} parent=1 // pred_check
      %p61 = pneg %p60
    $region19: #{tpu_custom_call.1} parent=1 // pred_check_branch
      %63 = sbr.rel (%p61) target = $region21
    $region20: #{tpu_custom_call.1} parent=1 // pred_region
      %64 = vst [vmem:[#allocation2] sm:$0xff] 0.0
    $region21: #{tpu_custom_call.1} parent=1 // pred_fallthru
      _
    %v65 = vld [vmem:[#allocation2] sm:$0xff]
    %v66 = vld [vmem:[#allocation3] sm:$0xff]
    %v67 = vld [vmem:[#allocation3 + $0x8] sm:$0xff]
    %v68 = vld [vmem:[#allocation6] sm:$0xff]
    %v69 = vld [vmem:[#allocation6 + $0x8] sm:$0xff]
    %v70 = vlog2.pop %v66
    %v71 = vmul.f32 %v70, 0.6931472
    %v72 = vlog2.pop %v67
    %v73 = vmul.f32 %v72, 0.6931472
    %v74 = vlog2.pop %v68
    %v75 = vmul.f32 %v74, 0.6931472
    %v76 = vlog2.pop %v69
    %v77 = vmul.f32 %v76, 0.6931472
    %v78 = vsub.f32 %v71, %v75
    %v79 = vsub.f32 %v73, %v77
    %v80 = vand.u32 2147483647, %v78
    %v81 = vand.u32 2147483647, %v79
    %v82 = vadd.f32 %v80, %v81
    %v83 = vadd.f32 %v82, 0.0
    %v84 = vadd.f32 %v65, %v83
    %85 = vst [vmem:[#allocation2] sm:$0xff] %v84
    // Predicated region
    $region22: #{tpu_custom_call.1} parent=1 // pred_check
      %p86 = pneg %p60
    $region23: #{tpu_custom_call.1} parent=1 // pred_check_branch
      %88 = sbr.rel (%p86) target = $region25
    $region24: #{tpu_custom_call.1} parent=1 // pred_region
      %v89 = vld [vmem:[#allocation2] sm:$0xff]
      %90 = vadd.xlane.f32.xlu0 %v89
      %v91 = vpop.xlane.xlu0 %90
      %v92 = vrot.slane %v91, 4
      %v93 = vadd.f32 %v91, %v92
      %v94 = vrot.slane %v93, 2
      %v95 = vadd.f32 %v93, %v94
      %v96 = vrot.slane %v95, 1
      %v97 = vadd.f32 %v95, %v96
      %s98 = vtos %v97
      %s99 = scalar_lea.smem [#allocation8], 0
      %100 = sst [smem:[%s99]] %s98
    $region25: #{tpu_custom_call.1} parent=1 // pred_fallthru
      _
    // Predicated region
    $region26: #{tpu_custom_call.1} parent=1 // pred_check
      _
    $region27: #{tpu_custom_call.1} parent=1 // pred_check_branch
      %102 = sbr.rel (0) target = $region29
    $region28: #{tpu_custom_call.1} parent=1 // pred_region
      %s104 = ssub.s32 16, 16
      %105 = vsyncadd [#allocation5], %s104
      %108 = dma.smem_to_hbm [#allocation8], 16, %s2, [#allocation5]
    $region29: #{tpu_custom_call.1} parent=1 // pred_fallthru
      _
    // Predicated region
    $region30: #{tpu_custom_call.1} parent=1 // pred_check
      _
    $region31: #{tpu_custom_call.1} parent=1 // pred_check_branch
      %110 = sbr.rel (0) target = $region33
    $region32: #{tpu_custom_call.1} parent=1 // pred_region
      %111 = dma.done [#allocation5], 16
    $region33: #{tpu_custom_call.1} parent=1 // pred_fallthru
      _
    %112 = sfence
    %113 = vsyncpa [#allocation4], 1
    %114 = vsyncpa [#allocation7], 1
    %115 = vsyncpa [#allocation5], 1

</llo_original>
